<compile_context>
chip_gen: v6e
topology: v6e:2x2x1
jax: 0.10.0
libtpu: 0.0.40
codegen_flags: <defaults>
</compile_context>

<pallas_src>
import math
from functools import partial

import jax
import jax.numpy as jnp
from jax.experimental import pallas as pl
from jax.experimental.pallas import tpu as pltpu

EPS = 1e-5  # PyTorch nn.LayerNorm default


def _layer_norm(x, g, b):
    """f32 LayerNorm (biased variance, eps=1e-5), usable in-kernel and as reference."""
    x = x.astype(jnp.float32)
    mean = jnp.mean(x, axis=-1, keepdims=True)
    var = jnp.mean((x - mean) ** 2, axis=-1, keepdims=True)
    return (x - mean) * jax.lax.rsqrt(var + EPS) * g + b


# ---------------------------------------------------------------------------
# Kernel 1: patch embedding (Conv2d with kernel==stride==patch) as a tiled bf16 matmul
# ---------------------------------------------------------------------------
def patch_embed_kernel(p_ref, w_ref, o_ref):
    o_ref[...] = jnp.dot(p_ref[...], w_ref[...], preferred_element_type=jnp.float32)


def patch_embed(patches, w_kd):
    """patches: (M, K) f32 im2col rows; w_kd: (K, D) f32.  bf16 MXU, f32 accumulate."""
    M, K = patches.shape
    D = w_kd.shape[1]
    tm = 128 if M >= 128 else max(8, ((M + 7) // 8) * 8)
    Mp = ((M + tm - 1) // tm) * tm
    p_pad = jnp.pad(patches, ((0, Mp - M), (0, 0))).astype(jnp.bfloat16)
    w_bf = w_kd.astype(jnp.bfloat16)
    out = pl.pallas_call(
        patch_embed_kernel,
        out_shape=jax.ShapeDtypeStruct((Mp, D), jnp.float32),
        grid=(Mp // tm,),
        in_specs=[pl.BlockSpec((tm, K), lambda i: (i, 0)),
                  pl.BlockSpec((K, D), lambda i: (0, 0))],
        out_specs=pl.BlockSpec((tm, D), lambda i: (i, 0)),
        compiler_params=pltpu.CompilerParams(dimension_semantics=("parallel",)),
    )(p_pad, w_bf)
    return out[:M]


# ---------------------------------------------------------------------------
# Kernel 2: fused  [+pos, ln_pre]  ->  n_layers transformer blocks  ->  ln_post(CLS)
#   grid = (B, n_layers); activation (S_pad, D) kept resident in VMEM scratch.
# ---------------------------------------------------------------------------
def vit_blocks_kernel(x_ref, pos_ref, lnpre_g, lnpre_b,
                      ln1g, ln1b, wqkv, bqkv, wout, bout,
                      ln2g, ln2b, w1, b1, w2, b2,
                      lnpost_g, lnpost_b,
                      cls_ref, x_vmem,
                      *, num_heads, head_dim, s_real):
    l = pl.program_id(1)
    n_layers = pl.num_programs(1)
    S, D = x_vmem.shape

    # Layer 0 for this image: fused embed_prep (add positional emb, ln_pre).
    @pl.when(l == 0)
    def _():
        x_vmem[...] = _layer_norm(x_ref[0] + pos_ref[...], lnpre_g[...], lnpre_b[...])

    x = x_vmem[...]                                                 # (S, D) f32

    # ---- attention branch (pre-LN) ----
    h = _layer_norm(x, ln1g[...], ln1b[...]).astype(jnp.bfloat16)
    qkv = jnp.dot(h, wqkv[...], preferred_element_type=jnp.float32) + bqkv[...]
    # heads batched into single dot_generals (no per-head unroll / concat)
    q = jnp.transpose(qkv[:, 0 * D:1 * D].reshape(S, num_heads, head_dim),
                      (1, 0, 2)).astype(jnp.bfloat16)               # (H, S, hd)
    k = jnp.transpose(qkv[:, 1 * D:2 * D].reshape(S, num_heads, head_dim),
                      (1, 0, 2)).astype(jnp.bfloat16)
    v = jnp.transpose(qkv[:, 2 * D:3 * D].reshape(S, num_heads, head_dim),
                      (1, 0, 2)).astype(jnp.bfloat16)
    # 1/sqrt(head_dim) is pre-folded into the Q columns of wqkv/bqkv.
    s = jnp.einsum('hqd,hkd->hqk', q, k,
                   preferred_element_type=jnp.float32)              # (H, S, S) f32
    if s_real != S:                                                 # mask padded keys
        col = jax.lax.broadcasted_iota(jnp.int32, (S, S), 1)
        s = s + jnp.where(col < s_real, 0.0, -1e30).astype(jnp.float32)
    s = s - jnp.max(s, axis=-1, keepdims=True)
    e = jnp.exp(s)
    p = e * pl.reciprocal(jnp.sum(e, axis=-1, keepdims=True), approx=True)
    o = jnp.einsum('hqk,hkd->hqd', p.astype(jnp.bfloat16), v,
                   preferred_element_type=jnp.float32)              # (H, S, hd)
    attn = jnp.transpose(o, (1, 0, 2)).reshape(S, D).astype(jnp.bfloat16)
    attn = jnp.dot(attn, wout[...], preferred_element_type=jnp.float32) + bout[...]
    x = x + attn

    # ---- MLP branch (pre-LN, QuickGELU) ----
    h = _layer_norm(x, ln2g[...], ln2b[...]).astype(jnp.bfloat16)
    h = jnp.dot(h, w1[...], preferred_element_type=jnp.float32) + b1[...]
    h = h * jax.nn.sigmoid(1.702 * h)                               # QuickGELU, f32
    h = jnp.dot(h.astype(jnp.bfloat16), w2[...],
                preferred_element_type=jnp.float32) + b2[...]
    x = x + h
    x_vmem[...] = x

    # Last layer: fused ln_post on the CLS token only.
    @pl.when(l == n_layers - 1)
    def _():
        cls_ref[0] = _layer_norm(x[0:1, :], lnpost_g[...], lnpost_b[...])


def run_vit_blocks(tok, pos, lnpre_g, lnpre_b, lnpost_g, lnpost_b,
                   layer_params, num_heads, head_dim, s_real):
    B, S_pad, D = tok.shape
    n_layers = layer_params[0].shape[0]

    def glob(a):          # global (layer-independent) param: full block, constant index
        return pl.BlockSpec(a.shape, lambda b, l, _nd=a.ndim: (0,) * _nd)

    def per_layer(a):     # stacked (n_layers, r, c) param: pick layer l, squeeze lead dim
        return pl.BlockSpec((None,) + a.shape[1:], lambda b, l: (l, 0, 0))

    kernel = partial(vit_blocks_kernel, num_heads=num_heads,
                     head_dim=head_dim, s_real=s_real)

    grid_spec = pltpu.PrefetchScalarGridSpec(
        num_scalar_prefetch=0,
        grid=(B, n_layers),
        in_specs=([pl.BlockSpec((1, S_pad, D), lambda b, l: (b, 0, 0)),
                   glob(pos), glob(lnpre_g), glob(lnpre_b)]
                  + [per_layer(a) for a in layer_params]
                  + [glob(lnpost_g), glob(lnpost_b)]),
        out_specs=pl.BlockSpec((1, 1, D), lambda b, l: (b, 0, 0)),
        scratch_shapes=[pltpu.VMEM((S_pad, D), jnp.float32)],
    )
    out = pl.pallas_call(
        kernel,
        out_shape=jax.ShapeDtypeStruct((B, 1, D), jnp.float32),
        grid_spec=grid_spec,
        compiler_params=pltpu.CompilerParams(
            dimension_semantics=("parallel", "arbitrary"),
            vmem_limit_bytes=64 * 1024 * 1024),
    )(tok, pos, lnpre_g, lnpre_b, *layer_params, lnpost_g, lnpost_b)
    return out[:, 0, :]


# ---------------------------------------------------------------------------
# Pure-JAX f32 reference (mirrors the PyTorch forward) for a correctness check.
# ---------------------------------------------------------------------------
def reference_forward(x, conv_w, cls_emb, pos_emb, ln_pre, torch_layers, ln_post,
                      num_heads, head_dim):
    B, C, H, W = x.shape
    D, P = conv_w.shape[0], conv_w.shape[-1]
    Hp, Wp = H // P, W // P
    L, K = Hp * Wp, C * P * P
    patches = (x.reshape(B, C, Hp, P, Wp, P)
                 .transpose(0, 2, 4, 1, 3, 5)
                 .reshape(B, L, K))
    tok = patches @ conv_w.reshape(D, K).T
    cls = jnp.broadcast_to(cls_emb[None, None, :], (B, 1, D))
    tok = jnp.concatenate([cls, tok], axis=1) + pos_emb[None]
    tok = _layer_norm(tok, ln_pre[0], ln_pre[1])
    S = tok.shape[1]
    scale = 1.0 / math.sqrt(head_dim)
    for (l1g, l1b, wqkv, bqkv, wout, bout, l2g, l2b, w1, b1, w2, b2) in torch_layers:
        idn = tok
        h = _layer_norm(tok, l1g, l1b)
        qkv = h @ wqkv.T + bqkv
        q, k, v = jnp.split(qkv, 3, axis=-1)
        q = q.reshape(B, S, num_heads, head_dim)
        k = k.reshape(B, S, num_heads, head_dim)
        v = v.reshape(B, S, num_heads, head_dim)
        s = jnp.einsum('bqhd,bkhd->bhqk', q, k) * scale
        p = jax.nn.softmax(s, axis=-1)
        o = jnp.einsum('bhqk,bkhd->bqhd', p, v).reshape(B, S, D)
        tok = idn + (o @ wout.T + bout)
        idn = tok
        h = _layer_norm(tok, l2g, l2b)
        h = h @ w1.T + b1
        h = h * jax.nn.sigmoid(1.702 * h)
        tok = idn + (h @ w2.T + b2)
    return _layer_norm(tok[:, 0, :], ln_post[0], ln_post[1])


# ---------------------------------------------------------------------------
if __name__ == "__main__":
    key = jax.random.PRNGKey(0)
    B, C, H, W = 2, 3, 16, 16          # small image, NCHW
    P = 4                              # patch size == conv stride
    D = 32                             # embed dim
    num_heads = 4
    head_dim = D // num_heads
    n_layers = 2
    Hp, Wp = H // P, W // P
    L = Hp * Wp                        # 16 patches
    S = L + 1                          # +1 CLS token
    S_pad = ((S + 7) // 8) * 8         # pad seq to a multiple of 8 (masked in attention)
    Dh = 4 * D                         # MLP hidden dim

    keys = iter(jax.random.split(key, 64))

    def randn(shape, scale=0.02):
        return (scale * jax.random.normal(next(keys), shape)).astype(jnp.float32)

    # --- deterministic synthetic parameters (PyTorch layouts) ---
    conv_w = randn((D, C, P, P))                       # Conv2d(C, D, P, stride=P, bias=False)
    cls_emb = randn((D,))                              # class_embedding
    pos_emb = randn((S, D))                            # positional_embedding
    ln_pre_g = 1.0 + randn((D,));  ln_pre_b = randn((D,))
    ln_post_g = 1.0 + randn((D,)); ln_post_b = randn((D,))

    scale = 1.0 / math.sqrt(head_dim)
    torch_layers = []
    stacks = {n: [] for n in ("ln1g", "ln1b", "wqkv", "bqkv", "wout", "bout",
                              "ln2g", "ln2b", "w1", "b1", "w2", "b2")}
    for _ in range(n_layers):
        ln1g = 1.0 + randn((D,)); ln1b = randn((D,))
        wqkv = randn((3 * D, D)); bqkv = randn((3 * D,))
        wout = randn((D, D));     bout = randn((D,))
        ln2g = 1.0 + randn((D,)); ln2b = randn((D,))
        w1 = randn((Dh, D));      b1 = randn((Dh,))
        w2 = randn((D, Dh));      b2 = randn((D,))
        torch_layers.append((ln1g, ln1b, wqkv, bqkv, wout, bout,
                             ln2g, ln2b, w1, b1, w2, b2))
        # kernel layout: x @ W (transposed), bf16 weights, 1/sqrt(hd) folded into Q.
        wqkv_t = wqkv.T.at[:, :D].multiply(scale)
        bqkv_k = bqkv.at[:D].multiply(scale)
        stacks["ln1g"].append(ln1g.reshape(1, D));  stacks["ln1b"].append(ln1b.reshape(1, D))
        stacks["wqkv"].append(wqkv_t.astype(jnp.bfloat16))
        stacks["bqkv"].append(bqkv_k.reshape(1, 3 * D))
        stacks["wout"].append(wout.T.astype(jnp.bfloat16))
        stacks["bout"].append(bout.reshape(1, D))
        stacks["ln2g"].append(ln2g.reshape(1, D));  stacks["ln2b"].append(ln2b.reshape(1, D))
        stacks["w1"].append(w1.T.astype(jnp.bfloat16)); stacks["b1"].append(b1.reshape(1, Dh))
        stacks["w2"].append(w2.T.astype(jnp.bfloat16)); stacks["b2"].append(b2.reshape(1, D))
    layer_params = [jnp.stack(stacks[n], axis=0) for n in
                    ("ln1g", "ln1b", "wqkv", "bqkv", "wout", "bout",
                     "ln2g", "ln2b", "w1", "b1", "w2", "b2")]

    x = jax.random.normal(next(keys), (B, C, H, W), jnp.float32)

    # --- glue: im2col patch extraction (equivalent to the stride-P conv) ---
    patches = (x.reshape(B, C, Hp, P, Wp, P)
                 .transpose(0, 2, 4, 1, 3, 5)
                 .reshape(B * L, C * P * P))
    w_flat = conv_w.reshape(D, C * P * P)              # (D, K) torch layout

    tok = patch_embed(patches, w_flat.T).reshape(B, L, D)          # (B, L, D)
    cls = jnp.broadcast_to(cls_emb[None, None, :], (B, 1, D))
    tok = jnp.concatenate([cls, tok], axis=1)                      # (B, S, D)
    tok = jnp.pad(tok, ((0, 0), (0, S_pad - S), (0, 0)))           # (B, S_pad, D)
    pos_pad = jnp.pad(pos_emb, ((0, S_pad - S), (0, 0)))           # (S_pad, D)

    out = run_vit_blocks(
        tok, pos_pad,
        ln_pre_g.reshape(1, D), ln_pre_b.reshape(1, D),
        ln_post_g.reshape(1, D), ln_post_b.reshape(1, D),
        layer_params, num_heads, head_dim, s_real=S)               # (B, D)
    out = jax.block_until_ready(out)

    # --- correctness check vs. f32 pure-JAX reference (bf16 MXU -> loose tolerance) ---
    ref = reference_forward(x, conv_w, cls_emb, pos_emb,
                            (ln_pre_g, ln_pre_b), torch_layers,
                            (ln_post_g, ln_post_b), num_heads, head_dim)
    assert out.shape == (B, D) and out.dtype == jnp.float32
    assert bool(jnp.all(jnp.isfinite(out)))
    max_err = float(jnp.max(jnp.abs(out - ref)))
    assert max_err < 0.15, f"max abs error vs reference: {max_err}"
    print("KERNEL_OK")
</pallas_src>

<mosaic_0001>
module attributes {stable_mosaic.version = 11 : i64} {
  func.func @patch_embed_kernel(%arg0: i32, %arg1: memref<32x48xbf16, #tpu.memory_space<vmem>>, %arg2: memref<48x32xbf16, #tpu.memory_space<vmem>>, %arg3: memref<32x32xf32, #tpu.memory_space<vmem>>) attributes {dimension_semantics = [#tpu.dimension_semantics<parallel>], iteration_bounds = array<i64: 1>, scalar_prefetch = 0 : i64, scratch_operands = 0 : i64, tpu.core_type = #tpu.core_type<tc>, window_params = [{transform_indices = @transform_0, window_bounds = array<i64: 32, 48>}, {pipeline_mode = #tpu.pipeline_mode<synchronous>, transform_indices = @transform_1, window_bounds = array<i64: 48, 32>}, {transform_indices = @transform_2, window_bounds = array<i64: 32, 32>}]} {
    %c0 = arith.constant 0 : index
    %c0_0 = arith.constant 0 : index
    %0 = vector.load %arg1[%c0, %c0_0] : memref<32x48xbf16, #tpu.memory_space<vmem>>, vector<32x48xbf16>
    %c0_1 = arith.constant 0 : index
    %c0_2 = arith.constant 0 : index
    %1 = vector.load %arg2[%c0_1, %c0_2] : memref<48x32xbf16, #tpu.memory_space<vmem>>, vector<48x32xbf16>
    %cst = arith.constant dense<0.000000e+00> : vector<32x32xf32>
    %2 = tpu.matmul %0, %1, %cst {dimension_numbers = #tpu.dot_dimension_numbers<[1], [0], [0], [1], [0, 0, 1, 1], [], []>} : vector<32x48xbf16>, vector<48x32xbf16>, vector<32x32xf32> -> vector<32x32xf32>
    %c0_3 = arith.constant 0 : index
    %c0_4 = arith.constant 0 : index
    %3 = vector.load %arg3[%c0_3, %c0_4] : memref<32x32xf32, #tpu.memory_space<vmem>>, vector<32x32xf32>
    tpu.vector_store %arg3[%c0_3, %c0_4], %2 {strides = array<i32>} : memref<32x32xf32, #tpu.memory_space<vmem>>, vector<32x32xf32>,
    return
  }
  func.func @transform_0(%arg0: i32) -> (i32, i32) {
    %c0_i32 = arith.constant 0 : i32
    %c0_i32_0 = arith.constant 0 : i32
    return %arg0, %c0_i32 : i32, i32
  }
  func.func @transform_1(%arg0: i32) -> (i32, i32) {
    %c0_i32 = arith.constant 0 : i32
    %c0_i32_0 = arith.constant 0 : i32
    %c0_i32_1 = arith.constant 0 : i32
    return %c0_i32, %c0_i32_0 : i32, i32
  }
  func.func @transform_2(%arg0: i32) -> (i32, i32) {
    %c0_i32 = arith.constant 0 : i32
    %c0_i32_0 = arith.constant 0 : i32
    return %arg0, %c0_i32 : i32, i32
  }
}

</mosaic_0001>

<llo_original>
// kernel: tpu_custom_call.1
$region0: #{tpu_custom_call.1}
  #allocation0 [shape = 'u32[]', space=smem, size = 0x4, offset = 0x4, fixed_abs, tag = 'smem constant byte address 0x4 - core index']
  #allocation1 [shape = 'u32[144,128]{1,0:T(1,128)}', space=vmem, size = 0x12000, scoped, tag = 'internal scratch']
  %s0 = inlined_call_operand.vmem [shape: bf16[32,48], index: 0, kind: input, shape index: {}]
  %s1 = inlined_call_operand.vmem [shape: bf16[48,32], index: 1, kind: input, shape index: {}]
  %s2 = inlined_call_operand.hbm [shape: f32[32,32], index: 2, kind: output, shape index: {}]
  %s3 = sld [smem:[#allocation0]]
  $region18: #{tpu_custom_call.1} parent=0
    _
  %s5 = ssub.s32 1, %s3
  %s6 = scalar_select 0, %s5, %s3
  $region1: #{tpu_custom_call.1} parent=0
    #allocation2 [shape = 'u8[16384]{0}', space=vmem, size = 0x4000, scoped, tag = 'output window, operand 0, single buffered']
    #allocation3 [shape = 's32[1]{0}', space=sflag, size = 0x4, scoped, tag = 'scoped memory for tpu_custom_call.1']
    %7 = vsyncpa [#allocation3], 0
    // Predicated region
    $region2: #{tpu_custom_call.1} parent=1 // pred_check
      _
    $region3: #{tpu_custom_call.1} parent=1 // pred_check_branch
      %9 = sbr.rel (0) target = $region5
    $region4: #{tpu_custom_call.1} parent=1 // pred_region
      _
    $region5: #{tpu_custom_call.1} parent=1 // pred_fallthru
      _
    // Predicated region
    $region6: #{tpu_custom_call.1} parent=1 // pred_check
      _
    $region7: #{tpu_custom_call.1} parent=1 // pred_check_branch
      %11 = sbr.rel (0) target = $region9
    $region8: #{tpu_custom_call.1} parent=1 // pred_region
      _
    $region9: #{tpu_custom_call.1} parent=1 // pred_fallthru
      _
    %v13 = vld [vmem:[%s0] sm:$0xf]
    %v14 = vld [vmem:[%s0 + $0x4] sm:$0xf]
    %v15 = vld [vmem:[%s0 + $0x8] sm:$0xf]
    %v16 = vld [vmem:[%s0 + $0xc] sm:$0xf]
    %v17 = vld [vmem:[%s1] sm:$0xf]
    %v18 = vld [vmem:[%s1 + $0x4] sm:$0xf]
    %v19 = vld [vmem:[%s1 + $0x8] sm:$0xf]
    %v20 = vld [vmem:[%s1 + $0xc] sm:$0xf]
    %v21 = vld [vmem:[%s1 + $0x10] sm:$0xf]
    %v22 = vld [vmem:[%s1 + $0x14] sm:$0xf]
    %v27 = vunpack.c.l.b16 %v13
    %v28 = vunpack.c.l.b16 %v14
    %v29 = vunpack.c.l.b16 %v15
    %v30 = vunpack.c.l.b16 %v16
    %v31 = vpack.c.b16 %v28, %v27
    %v32 = vpack.c.b16 %v30, %v29
    %v39 = vunpack.c.l.b16 %v17
    %v40 = vunpack.c.l.b16 %v18
    %v41 = vunpack.c.l.b16 %v19
    %v42 = vunpack.c.l.b16 %v20
    %v43 = vunpack.c.l.b16 %v21
    %v44 = vunpack.c.l.b16 %v22
    %v45 = vpack.c.b16 %v40, %v39
    %v46 = vpack.c.b16 %v42, %v41
    %v47 = vpack.c.b16 %v44, %v43
    %vm51 = vcmask 392192
    %v53 = vsel %vm51, %v31, 0
    %v56 = vsel %vm51, %v32, 0
    %58 = vmatprep.subr.bf16.mxu0 0
    %59 = vmatpush1.bf16.msra.mxu0 0
    %60 = vmatprep.subr.bf16.mxu0 0
    %61 = vmatpush1.bf16.msra.mxu0 0
    %62 = vmatprep.subr.bf16.mxu0 0
    %63 = vmatpush1.bf16.msra.mxu0 0
    %64 = vmatprep.subr.bf16.mxu0 0
    %65 = vmatpush1.bf16.msra.mxu0 0
    %66 = vmatprep.subr.bf16.mxu0 0
    %67 = vmatpush1.bf16.msra.mxu0 0
    %68 = vmatprep.subr.bf16.mxu0 0
    %69 = vmatpush1.bf16.msra.mxu0 %v47
    %70 = vmatprep.subr.bf16.mxu0 0
    %71 = vmatpush1.bf16.msra.mxu0 %v46
    %72 = vmatprep.subr.bf16.mxu0 0
    %73 = vmatpush1.bf16.msra.mxu0 %v45
    %74 = vmatprep.subr.bf16.mxu0 0
    %75 = vmatpush2.bf16.msra.mxu0 0
    %76 = vmatprep.subr.bf16.mxu0 0
    %77 = vmatpush2.bf16.msra.mxu0 0
    %78 = vmatprep.subr.bf16.mxu0 0
    %79 = vmatpush2.bf16.msra.mxu0 0
    %80 = vmatprep.subr.bf16.mxu0 0
    %81 = vmatpush2.bf16.msra.mxu0 0
    %82 = vmatprep.subr.bf16.mxu0 0
    %83 = vmatpush2.bf16.msra.mxu0 0
    %84 = vmatprep.subr.bf16.mxu0 0
    %85 = vmatpush2.bf16.msra.mxu0 0
    %86 = vmatprep.subr.bf16.mxu0 0
    %87 = vmatpush2.bf16.msra.mxu0 0
    %88 = vmatprep.subr.bf16.mxu0 0
    %89 = vmatpush2.bf16.msra.mxu0 0
    %90 = vmatprep.mubr.bf16.mxu0 0
    %91 = vmatmul.mubr.bf16.gmra.mxu0 %v53
    %v92 = vpop.f32.mrf.mxu0
    %v93 = vadd.f32 0.0, %v92
    %v94 = vpop.f32.mrf.mxu0
    %v95 = vpop.f32.mrf.mxu0
    %v96 = vadd.f32 0.0, %v95
    %v97 = vpop.f32.mrf.mxu0
    %98 = vmatprep.mubr.bf16.mxu0 0
    %99 = vmatmul.mubr.bf16.gmra.mxu0 %v56
    %v100 = vpop.f32.mrf.mxu0
    %v101 = vadd.f32 0.0, %v100
    %v102 = vpop.f32.mrf.mxu0
    %v103 = vpop.f32.mrf.mxu0
    %v104 = vadd.f32 0.0, %v103
    %v105 = vpop.f32.mrf.mxu0
    %106 = vdwg.mxu0
    %vm107 = vcmask 261120
    %108 = vst.msk [vmem:[#allocation2] sm:$0xff] %vm107, %v93
    %109 = vst.msk [vmem:[#allocation2 + $0x8] sm:$0xff] %vm107, %v96
    %110 = vst.msk [vmem:[#allocation2 + $0x10] sm:$0xff] %vm107, %v101
    %111 = vst.msk [vmem:[#allocation2 + $0x18] sm:$0xff] %vm107, %v104
    // Predicated region
    $region10: #{tpu_custom_call.1} parent=1 // pred_check
      _
    $region11: #{tpu_custom_call.1} parent=1 // pred_check_branch
      %113 = sbr.rel (0) target = $region13
    $region12: #{tpu_custom_call.1} parent=1 // pred_region
      %s115 = ssub.s32 512, 512
      %116 = vsyncadd [#allocation3], %s115
      %s117 = sshll.u32 [#allocation2], 4
      %s118 = int_to_ptr.vmem [resolvable:$true] %s117
      %123 = dma.vmem_to_hbm [thread:$0]  %s118, 512, %s2, [#allocation3], 128, 128, 8
    $region13: #{tpu_custom_call.1} parent=1 // pred_fallthru
      _
    // Predicated region
    $region14: #{tpu_custom_call.1} parent=1 // pred_check
      _
    $region15: #{tpu_custom_call.1} parent=1 // pred_check_branch
      %125 = sbr.rel (0) target = $region17
    $region16: #{tpu_custom_call.1} parent=1 // pred_region
      %126 = dma.done [#allocation3], 512
    $region17: #{tpu_custom_call.1} parent=1 // pred_fallthru
      _
    %127 = vsyncpa [#allocation3], 1

</llo_original>
